<compile_context>
chip_gen: v7x
topology: tpu7x:2x2x1
jax: 0.10.0
libtpu: 0.0.40
codegen_flags: <defaults>
</compile_context>

<pallas_src>
import functools

import jax
import jax.numpy as jnp
from jax.experimental import pallas as pl
from jax.experimental.pallas import tpu as pltpu


def _round_up(x, m):
    return (x + m - 1) // m * m


def _label_smoothing_kernel(x_ref, tgt_ref, out_ref, *,
                            conf, w_off, tile_n, n_total, needs_mask):
    i = pl.program_id(0)

    x = x_ref[...].astype(jnp.float32)                       # (TN, C)
    tn, c = x.shape

    # Numerically stable log-sum-exp along the class (lane) axis.
    m = jnp.max(x, axis=-1, keepdims=True)                   # (TN, 1)
    lse = jnp.log(jnp.sum(jnp.exp(x - m), axis=-1, keepdims=True))  # (TN, 1)

    # Weighted class sums on RAW x (independent of the max pass):
    #   loss_row = (m + lse) - [conf * x_target + (smooth/C) * sum_c x]
    tgt = tgt_ref[...]                                        # (TN, 1) int32
    col = jax.lax.broadcasted_iota(jnp.int32, (tn, c), 1)
    x_tgt = jnp.sum(jnp.where(col == tgt, x, 0.0), axis=-1, keepdims=True)
    x_sum = jnp.sum(x, axis=-1, keepdims=True)
    loss = (m + lse) - (conf * x_tgt + w_off * x_sum)         # (TN, 1) per-row

    # Per-tile partial sum, written as a lane-dense (1, 1, 128) block so each
    # grid step owns its own output block -> fully parallel grid.
    out_ref[...] = jnp.broadcast_to(jnp.sum(loss), (1, 1, 128))

    if needs_mask:
        # Only the (partial) last tile pays the row-mask; the masked re-sum
        # overwrites the unmasked write above. jnp.where (select) also discards
        # any NaN/Inf produced by the undefined padded-row data.
        @pl.when(i == pl.num_programs(0) - 1)
        def _():
            row = jax.lax.broadcasted_iota(jnp.int32, (tn, 1), 0) + i * tile_n
            masked = jnp.where(row < n_total, loss, 0.0)
            out_ref[...] = jnp.broadcast_to(jnp.sum(masked), (1, 1, 128))


def _pick_tile_n(n_rows, n_classes, x_dtype):
    """Generation-aware row-tile size + VMEM capacity."""
    try:
        vmem_cap = pltpu.get_tpu_info().vmem_capacity_bytes
    except Exception:
        vmem_cap = 64 * 1024 * 1024          # conservative (v7x-sized) fallback
    itemsize = jnp.dtype(x_dtype).itemsize
    c_pad = _round_up(max(n_classes, 128), 128)

    # Per-row VMEM footprint: 2 double-buffered x tiles, ~2 f32 (TN, C)
    # in-kernel temporaries (post algebra simplification), and 2 double-buffered
    # (TN, 1) -> lane-padded (TN, 128) int32 target tiles.
    per_row = c_pad * (2 * itemsize + 2 * 4) + 2 * 128 * 4
    budget = vmem_cap // 3                   # headroom for compiler scratch
    align = 8 * max(1, 4 // itemsize)        # 8 rows for f32, 16 for bf16
    vmem_limit = int(vmem_cap * 3 // 4)

    if align * per_row > vmem_limit:
        # TODO(synk): class-split grid axis (online-LSE carry) for huge vocabs.
        raise ValueError(
            f"num_classes={n_classes} too large for a single-pass row tile on "
            f"this TPU generation (VMEM={vmem_cap >> 20} MiB); a class-split "
            f"kernel is required.")

    tile_n_fit = budget // per_row
    # Big enough that per-step DMA time dwarfs the ~0.35us fixed overhead
    # (>= ~8 MiB of x per step), but no bigger than needed.
    target_x_bytes = 8 * 1024 * 1024
    tile_n_target = max(align, target_x_bytes // (c_pad * itemsize))
    tile_n = min(tile_n_fit, tile_n_target)
    tile_n = max(align, tile_n // align * align)
    # Keep >= ~4 grid steps (>= 2 per TensorCore on v7x) when N allows it.
    tile_n = min(tile_n, _round_up(-(-n_rows // 4), align))
    tile_n = max(align, tile_n)
    return int(tile_n), int(vmem_cap)


def label_smoothing_loss(x, target, smoothing=0.1, tile_n=None):
    """x: (N, C) float logits (f32 or bf16); target: (N,) int class indices.

    Returns the scalar f32 mean label-smoothed NLL, matching the PyTorch module
    (smoothing mass spread uniformly over all C classes, including the target).
    """
    N, C = x.shape
    confidence = 1.0 - smoothing

    chosen_tile_n, vmem_cap = _pick_tile_n(N, C, x.dtype)
    if tile_n is None:
        tile_n = chosen_tile_n

    num_tiles = int(pl.cdiv(N, tile_n))
    target2d = target.reshape(N, 1).astype(jnp.int32)

    kernel = functools.partial(
        _label_smoothing_kernel,
        conf=confidence,
        w_off=smoothing / C,
        tile_n=tile_n,
        n_total=N,
        needs_mask=(N % tile_n) != 0,
    )

    partials = pl.pallas_call(
        kernel,
        out_shape=jax.ShapeDtypeStruct((num_tiles, 1, 128), jnp.float32),
        grid_spec=pltpu.PrefetchScalarGridSpec(
            num_scalar_prefetch=0,
            grid=(num_tiles,),
            in_specs=[
                pl.BlockSpec((tile_n, C), lambda i: (i, 0)),   # x row tile
                pl.BlockSpec((tile_n, 1), lambda i: (i, 0)),   # target row tile
            ],
            out_specs=pl.BlockSpec((1, 1, 128), lambda i: (i, 0, 0)),
        ),
        compiler_params=pltpu.CompilerParams(
            dimension_semantics=("parallel",),          # v7x: shard rows over both TCs
            vmem_limit_bytes=int(vmem_cap * 3 // 4),    # raise scoped VMEM for big tiles
        ),
    )(x, target2d)

    # Final reduction over the per-tile partials (tiny) + mean normalization.
    return jnp.sum(partials[:, 0, 0]) / jnp.float32(N)


def _reference(x, target, smoothing):
    confidence = 1.0 - smoothing
    logprobs = jax.nn.log_softmax(x.astype(jnp.float32), axis=-1)
    nll = -jnp.take_along_axis(logprobs, target[:, None].astype(jnp.int32), axis=-1)[:, 0]
    smooth = -jnp.mean(logprobs, axis=-1)
    return jnp.mean(confidence * nll + smoothing * smooth)


if __name__ == "__main__":
    key = jax.random.PRNGKey(0)
    kx, kt = jax.random.split(key)

    smoothing = 0.1

    # Small shapes consistent with (batch, num_classes).
    N, C = 16, 32
    x = jax.random.normal(kx, (N, C), dtype=jnp.float32)
    target = jax.random.randint(kt, (N,), 0, C, dtype=jnp.int32)

    loss = jax.block_until_ready(label_smoothing_loss(x, target, smoothing=smoothing))
    ref = _reference(x, target, smoothing)
    assert jnp.allclose(loss, ref, atol=1e-5, rtol=1e-5), (loss, ref)

    # Padded-row path (N not a multiple of the chosen tile).
    N2 = 20
    x2 = jax.random.normal(kx, (N2, C), dtype=jnp.float32)
    target2 = jax.random.randint(kt, (N2,), 0, C, dtype=jnp.int32)
    loss2 = jax.block_until_ready(label_smoothing_loss(x2, target2, smoothing=smoothing))
    ref2 = _reference(x2, target2, smoothing)
    assert jnp.allclose(loss2, ref2, atol=1e-5, rtol=1e-5), (loss2, ref2)

    # bf16 logits pass-through (halves HBM read bytes on v5e/v6e).
    x3 = x.astype(jnp.bfloat16)
    loss3 = jax.block_until_ready(label_smoothing_loss(x3, target, smoothing=smoothing))
    ref3 = _reference(x3, target, smoothing)
    assert jnp.allclose(loss3, ref3, atol=1e-4, rtol=1e-4), (loss3, ref3)

    print("KERNEL_OK")
</pallas_src>

<mosaic_0001>
module attributes {stable_mosaic.version = 11 : i64} {
  func.func @_label_smoothing_kernel(%arg0: i32, %arg1: memref<8x32xf32, #tpu.memory_space<vmem>>, %arg2: memref<8x1xi32, #tpu.memory_space<vmem>>, %arg3: memref<1x1x128xf32, #tpu.memory_space<vmem>>) attributes {dimension_semantics = [#tpu.dimension_semantics<parallel>], iteration_bounds = array<i64: 2>, scalar_prefetch = 0 : i64, scratch_operands = 0 : i64, tpu.core_type = #tpu.core_type<tc>, window_params = [{transform_indices = @transform_0, window_bounds = array<i64: 8, 32>}, {transform_indices = @transform_1, window_bounds = array<i64: 8, 1>}, {transform_indices = @transform_2, window_bounds = array<i64: 1, 1, 128>}]} {
    %c0 = arith.constant 0 : index
    %c0_0 = arith.constant 0 : index
    %0 = vector.load %arg1[%c0, %c0_0] : memref<8x32xf32, #tpu.memory_space<vmem>>, vector<8x32xf32>
    %cst = arith.constant dense<0xFF800000> : vector<8xf32>
    %1 = vector.multi_reduction <maximumf>, %0, %cst [1] : vector<8x32xf32> to vector<8xf32>
    %2 = vector.shape_cast %1 : vector<8xf32> to vector<8x1xf32>
    %3 = vector.broadcast %2 : vector<8x1xf32> to vector<8x32xf32>
    %4 = arith.subf %0, %3 : vector<8x32xf32>
    %5 = math.exp %4 : vector<8x32xf32>
    %cst_1 = arith.constant dense<0.000000e+00> : vector<8xf32>
    %6 = vector.multi_reduction <add>, %5, %cst_1 [1] : vector<8x32xf32> to vector<8xf32>
    %7 = vector.shape_cast %6 : vector<8xf32> to vector<8x1xf32>
    %8 = math.log %7 : vector<8x1xf32>
    %c0_2 = arith.constant 0 : index
    %c0_3 = arith.constant 0 : index
    %9 = vector.load %arg2[%c0_2, %c0_3] : memref<8x1xi32, #tpu.memory_space<vmem>>, vector<8x1xi32>
    %10 = tpu.iota {dimensions = array<i32: 1>} : vector<8x32xi32>
    %11 = vector.broadcast %9 : vector<8x1xi32> to vector<8x32xi32>
    %12 = arith.cmpi eq, %10, %11 : vector<8x32xi32>
    %cst_4 = arith.constant 0.000000e+00 : f32
    %13 = vector.broadcast %cst_4 : f32 to vector<8x32xf32>
    %14 = arith.select %12, %0, %13 : vector<8x32xi1>, vector<8x32xf32>
    %cst_5 = arith.constant dense<0.000000e+00> : vector<8xf32>
    %15 = vector.multi_reduction <add>, %14, %cst_5 [1] : vector<8x32xf32> to vector<8xf32>
    %16 = vector.shape_cast %15 : vector<8xf32> to vector<8x1xf32>
    %cst_6 = arith.constant dense<0.000000e+00> : vector<8xf32>
    %17 = vector.multi_reduction <add>, %0, %cst_6 [1] : vector<8x32xf32> to vector<8xf32>
    %18 = vector.shape_cast %17 : vector<8xf32> to vector<8x1xf32>
    %19 = arith.addf %2, %8 : vector<8x1xf32>
    %cst_7 = arith.constant 0.899999976 : f32
    %20 = vector.broadcast %cst_7 : f32 to vector<8x1xf32>
    %21 = arith.mulf %20, %16 : vector<8x1xf32>
    %cst_8 = arith.constant 3.125000e-03 : f32
    %22 = vector.broadcast %cst_8 : f32 to vector<8x1xf32>
    %23 = arith.mulf %22, %18 : vector<8x1xf32>
    %24 = arith.addf %21, %23 : vector<8x1xf32>
    %25 = arith.subf %19, %24 : vector<8x1xf32>
    %26 = vector.shape_cast %25 : vector<8x1xf32> to vector<1x8x1xf32>
    %cst_9 = arith.constant dense<0.000000e+00> : vector<1xf32>
    %27 = vector.multi_reduction <add>, %26, %cst_9 [1, 2] : vector<1x8x1xf32> to vector<1xf32>
    %28 = vector.shape_cast %27 : vector<1xf32> to vector<1x1x1xf32>
    %29 = vector.extract %28[0, 0, 0] : f32 from vector<1x1x1xf32>
    %30 = vector.broadcast %29 : f32 to vector<1x1x128xf32>
    %c0_10 = arith.constant 0 : index
    %c0_11 = arith.constant 0 : index
    %c0_12 = arith.constant 0 : index
    %31 = vector.load %arg3[%c0_10, %c0_11, %c0_12] : memref<1x1x128xf32, #tpu.memory_space<vmem>>, vector<1x1x128xf32>
    tpu.vector_store %arg3[%c0_10, %c0_11, %c0_12], %30 {strides = array<i32>} : memref<1x1x128xf32, #tpu.memory_space<vmem>>, vector<1x1x128xf32>,
    return
  }
  func.func @transform_0(%arg0: i32) -> (i32, i32) {
    %c0_i32 = arith.constant 0 : i32
    %c0_i32_0 = arith.constant 0 : i32
    return %arg0, %c0_i32 : i32, i32
  }
  func.func @transform_1(%arg0: i32) -> (i32, i32) {
    %c0_i32 = arith.constant 0 : i32
    %c0_i32_0 = arith.constant 0 : i32
    return %arg0, %c0_i32 : i32, i32
  }
  func.func @transform_2(%arg0: i32) -> (i32, i32, i32) {
    %c0_i32 = arith.constant 0 : i32
    %c0_i32_0 = arith.constant 0 : i32
    %c0_i32_1 = arith.constant 0 : i32
    return %arg0, %c0_i32, %c0_i32_0 : i32, i32, i32
  }
}

</mosaic_0001>

<llo_original>
// kernel: tpu_custom_call.1
$region0: #{tpu_custom_call.1}
  #allocation0 [shape = 'u32[]', space=smem, size = 0x4, offset = 0x4, fixed_abs, tag = 'smem constant byte address 0x4 - core index']
  #allocation1 [shape = 'u32[144,128]{1,0:T(1,128)}', space=vmem, size = 0x12000, scoped, tag = 'internal scratch']
  %s0 = inlined_call_operand.vmem [shape: f32[16,32], index: 0, kind: input, shape index: {}]
  %s1 = inlined_call_operand.vmem [shape: s32[16,1], index: 1, kind: input, shape index: {}]
  %s2 = inlined_call_operand.hbm [shape: f32[2,1,128], index: 2, kind: output, shape index: {}]
  %s3 = sld [smem:[#allocation0]]
  $region41: #{tpu_custom_call.1} parent=0
    _
  %s5 = ssub.s32 1, %s3
  %s6 = scalar_select 0, %s5, %s3
  $region1: #{tpu_custom_call.1} parent=0
    #allocation2 [shape = 'u8[1024]{0}', space=vmem, size = 0x400, scoped, tag = 'output window, operand 0']
    #allocation3 [shape = 's32[2]{0}', space=sflag, size = 0x8, scoped, tag = 'scoped memory for tpu_custom_call.1']
    %7 = vsyncpa [#allocation3], 0
    %s8 = scalar_lea.sflag [#allocation3], 1
    %9 = vsyncpa %s8, 0
    loop: start=0, step=1, limit=4
    $region2: #{tpu_custom_call.1} parent=1 // loop_pre_header
      _
    $region3: #{tpu_custom_call.1} parent=1 // loop_header
      %s11 = sphi 0, %s15
      %p12 = scmp.ge.s32.totalorder %s11, 4
      %s21 = sphi 0, %s23
      %s24 = sphi 0, %s21
      %s25 = sphi 0, %s24
      %s41 = sphi 0, %s25
      %s47 = sphi 0, %s49
      %s50 = sphi 0, %s47
      %s51 = sphi 0, %s50
      %s67 = sphi 0, %s51
      %s73 = sphi 0, %s75
      %s76 = sphi 0, %s73
      %s77 = sphi 0, %s76
      %s93 = sphi 0, %s77
    $region4: #{tpu_custom_call.1} parent=1 // loop_header_branch
      %14 = sbr.rel (%p12) target = $region8
    $region5: #{tpu_custom_call.1} parent=1 // loop_body
      %s16 = ssub.s32 %s11, 1
      %s17 = ssub.s32 %s11, 2
      %s18 = sadd.s32 %s11, 1
      %s19 = ssub.s32 %s11, %s18
      %p20 = scmp.eq.s32.totalorder %s19, 0
      %s22 = sadd.s32 %s21, 1
      %s23 = scalar_select %p20, %s21, %s22
      %p26 = pneg %p20
      %p27 = scmp.eq.s32.totalorder %s11, 1
      %p28 = por %p26, %p27
      %p29 = scmp.ne.s32.totalorder %s21, %s24
      %p30 = scmp.eq.s32.totalorder %s11, 0
      %p31 = por %p29, %p30
      %p32 = scmp.ne.s32.totalorder %s21, %s24
      %p33 = scmp.eq.s32.totalorder %s16, 1
      %p34 = por %p32, %p33
      %p35 = scmp.ne.s32.totalorder %s24, %s25
      %p36 = scmp.eq.s32.totalorder %s16, 0
      %p37 = por %p35, %p36
      %p38 = scmp.ne.s32.totalorder %s24, %s25
      %p39 = scmp.eq.s32.totalorder %s17, 1
      %p40 = por %p38, %p39
      %p42 = scmp.ne.s32.totalorder %s25, %s41
      %p43 = scmp.eq.s32.totalorder %s17, 0
      %p44 = por %p42, %p43
      %s45 = ssub.s32 %s11, %s18
      %p46 = scmp.eq.s32.totalorder %s45, 0
      %s48 = sadd.s32 %s47, 1
      %s49 = scalar_select %p46, %s47, %s48
      %p52 = pneg %p46
      %p53 = scmp.eq.s32.totalorder %s11, 1
      %p54 = por %p52, %p53
      %p55 = scmp.ne.s32.totalorder %s47, %s50
      %p56 = scmp.eq.s32.totalorder %s11, 0
      %p57 = por %p55, %p56
      %p58 = scmp.ne.s32.totalorder %s47, %s50
      %p59 = scmp.eq.s32.totalorder %s16, 1
      %p60 = por %p58, %p59
      %p61 = scmp.ne.s32.totalorder %s50, %s51
      %p62 = scmp.eq.s32.totalorder %s16, 0
      %p63 = por %p61, %p62
      %p64 = scmp.ne.s32.totalorder %s50, %s51
      %p65 = scmp.eq.s32.totalorder %s17, 1
      %p66 = por %p64, %p65
      %p68 = scmp.ne.s32.totalorder %s51, %s67
      %p69 = scmp.eq.s32.totalorder %s17, 0
      %p70 = por %p68, %p69
      %s71 = ssub.s32 %s11, %s18
      %p72 = scmp.eq.s32.totalorder %s71, 0
      %s74 = sadd.s32 %s73, 1
      %s75 = scalar_select %p72, %s73, %s74
      %p78 = pneg %p72
      %p79 = scmp.eq.s32.totalorder %s11, 1
      %p80 = por %p78, %p79
      %p81 = scmp.ne.s32.totalorder %s73, %s76
      %p82 = scmp.eq.s32.totalorder %s11, 0
      %p83 = por %p81, %p82
      %p84 = scmp.ne.s32.totalorder %s73, %s76
      %p85 = scmp.eq.s32.totalorder %s16, 1
      %p86 = por %p84, %p85
      %p87 = scmp.ne.s32.totalorder %s76, %s77
      %p88 = scmp.eq.s32.totalorder %s16, 0
      %p89 = por %p87, %p88
      %p90 = scmp.ne.s32.totalorder %s76, %s77
      %p91 = scmp.eq.s32.totalorder %s17, 1
      %p92 = por %p90, %p91
      %p94 = scmp.ne.s32.totalorder %s77, %s93
      %p95 = scmp.eq.s32.totalorder %s17, 0
      %p96 = por %p94, %p95
      %p97 = scmp.le.s32.totalorder 1, %s11
      %p98 = scmp.lt.s32.totalorder %s11, 3
      %p99 = pnand %p97, %p98
      %p100 = pneg %p99
      // Predicated region
      $region9: #{tpu_custom_call.1} parent=5 // pred_check
        _
      $region10: #{tpu_custom_call.1} parent=5 // pred_check_branch
        %102 = sbr.rel (%p99) target = $region12
      $region11: #{tpu_custom_call.1} parent=5 // pred_region
        %s103 = ssub.s32 %s11, 1
      $region12: #{tpu_custom_call.1} parent=5 // pred_fallthru
        _
      %p104 = scmp.lt.s32.totalorder %s11, 2
      // Predicated region
      $region13: #{tpu_custom_call.1} parent=5 // pred_check
        %p105 = pneg %p104
      $region14: #{tpu_custom_call.1} parent=5 // pred_check_branch
        %107 = sbr.rel (%p105) target = $region16
      $region15: #{tpu_custom_call.1} parent=5 // pred_region
        // Predicated region
        $region17: #{tpu_custom_call.1} parent=15 // pred_check
          %p108 = pneg %p31
        $region18: #{tpu_custom_call.1} parent=15 // pred_check_branch
          %110 = sbr.rel (%p108) target = $region20
        $region19: #{tpu_custom_call.1} parent=15 // pred_region
          %p111 = scmp.lt.s32.totalorder %s11, 1
          %s112 = scalar_select %p111, %s11, 1
          %s113 = smul.addr %s112, 8
          %s114 = scalar_lea.vmem %s0, %s113
        $region20: #{tpu_custom_call.1} parent=15 // pred_fallthru
          _
        // Predicated region
        $region21: #{tpu_custom_call.1} parent=15 // pred_check
          %p115 = pneg %p57
        $region22: #{tpu_custom_call.1} parent=15 // pred_check_branch
          %117 = sbr.rel (%p115) target = $region24
        $region23: #{tpu_custom_call.1} parent=15 // pred_region
          %p118 = scmp.lt.s32.totalorder %s11, 1
          %s119 = scalar_select %p118, %s11, 1
          %s120 = smul.addr %s119, 8
          %s121 = scalar_lea.vmem %s1, %s120
        $region24: #{tpu_custom_call.1} parent=15 // pred_fallthru
          _
      $region16: #{tpu_custom_call.1} parent=5 // pred_fallthru
        _
      %p122 = scmp.le.s32.totalorder 1, %s11
      %p123 = scmp.lt.s32.totalorder %s11, 3
      %p124 = pnand %p122, %p123
      %p125 = pneg %p124
      // Predicated region
      $region25: #{tpu_custom_call.1} parent=5 // pred_check
        _
      $region26: #{tpu_custom_call.1} parent=5 // pred_check_branch
        %127 = sbr.rel (%p124) target = $region28
      $region27: #{tpu_custom_call.1} parent=5 // pred_region
        %s128 = ssub.s32 %s11, 1
        %p129 = scmp.lt.s32.totalorder %s16, 1
        %s130 = scalar_select %p129, %s16, 1
        %s131 = smul.addr %s130, 8
        %s132 = scalar_lea.vmem %s0, %s131
        %p133 = pneg %p37
        %p134 = pneg %p34
        %p135 = scmp.lt.s32.totalorder %s16, 1
        %s136 = scalar_select %p135, %s16, 1
        %s137 = smul.addr %s136, 8
        %s138 = scalar_lea.vmem %s1, %s137
        %p139 = pneg %p63
        %p140 = pneg %p60
        %p141 = pneg %p89
        %p142 = pneg %p86
        %s143 = sand.u32 %s76, 1
        %s144 = scalar_lea.sflag [#allocation3], %s143
        %s145 = sand.u32 %s76, 1
        %s146 = scalar_lea.vmem [#allocation2], %s145
        %p147 = scmp.lt.s32.totalorder %s16, 1
        %s148 = scalar_select %p147, %s16, 1
        %s149 = smul.addr %s148, 8
        %s150 = scalar_lea.vmem %s0, %s149
        %p151 = scmp.lt.s32.totalorder %s16, 1
        %s152 = scalar_select %p151, %s16, 1
        %s153 = smul.addr %s152, 8
        %s154 = scalar_lea.vmem %s1, %s153
        %v155 = vld [vmem:[%s150] sm:$0xff]
        %vm156 = vcmask 261120
        %v157 = vsel %vm156, %v155, -inf
        %158 = vmax.xlane.f32.xlu0 %v157
        %v159 = vpop.xlane.xlu0 %158
        %v160 = vsub.f32 %v155, %v159
        %v161 = vmul.f32 %v160, 1.442695
        %v162 = vpow.pop %v161
        %v163 = vsel %vm156, %v162, 0.0
        %164 = vadd.xlane.f32.xlu0 %v163
        %v165 = vpop.xlane.xlu0 %164
        %v166 = vlog2.pop %v165
        %v167 = vmul.f32 %v166, 0.6931472
        %v168 = vld [vmem:[%s154] sm:$0xff]
        %v169 = vlaneseq
        %v170 = vand.u32 %v169, 127
        %171 = vset.pattern.permute.xlu0 0
        %172 = vperm.xlu0 %171, %v168
        %v173 = vpop.permute.xlu0 %172
        %vm174 = vcmp.eq.s32.totalorder %v170, %v173
        %v175 = vsel %vm174, %v155, 0.0
        %v176 = vsel %vm156, %v175, 0.0
        %177 = vadd.xlane.f32.xlu0 %v176
        %v178 = vpop.xlane.xlu0 %177
        %v179 = vsel %vm156, %v155, 0.0
        %180 = vadd.xlane.f32.xlu0 %v179
        %v181 = vpop.xlane.xlu0 %180
        %v182 = vadd.f32 %v159, %v167
        %v183 = vmul.f32 %v178, 0.9
        %v184 = vmul.f32 %v181, 0.003125
        %v185 = vadd.f32 %v183, %v184
        %v186 = vsub.f32 %v182, %v185
        %vm187 = vcmask 7168
        %v188 = vsel %vm187, %v186, 0.0
        %189 = vadd.xlane.f32.xlu0 %v188
        %v190 = vpop.xlane.xlu0 %189
        %v191 = vrot.slane %v190, 4
        %v192 = vadd.f32 %v190, %v191
        %v193 = vrot.slane %v192, 2
        %v194 = vadd.f32 %v192, %v193
        %v195 = vrot.slane %v194, 1
        %v196 = vadd.f32 %v194, %v195
        %s197 = vtos %v196
        %v198 = vstv %s197
        %199 = vst [vmem:[%s146] sm:$0x1] %v198
        %s200 = sand.u32 %s76, 1
        %s201 = scalar_lea.sflag [#allocation3], %s200
        %s202 = sand.u32 %s76, 1
        %s203 = scalar_lea.vmem [#allocation2], %s202
        // Predicated region
        $region29: #{tpu_custom_call.1} parent=27 // pred_check
          %p204 = pneg %p86
        $region30: #{tpu_custom_call.1} parent=27 // pred_check_branch
          %206 = sbr.rel (%p204) target = $region32
        $region31: #{tpu_custom_call.1} parent=27 // pred_region
          %s208 = ssub.s32 16, 16
          %209 = vsyncadd %s201, %s208
          %s210 = smul.addr %s16, 16
          %s211 = scalar_lea.hbm %s2, %s210
          %s213 = sshll.u32 %s203, 4
          %s214 = int_to_ptr.vmem [resolvable:$true] %s213
          %216 = dma.vmem_to_hbm [thread:$0]  %s214, 16, %s211, %s201
        $region32: #{tpu_custom_call.1} parent=27 // pred_fallthru
          _
      $region28: #{tpu_custom_call.1} parent=5 // pred_fallthru
        _
      %p217 = scmp.le.s32.totalorder 2, %s11
      // Predicated region
      $region33: #{tpu_custom_call.1} parent=5 // pred_check
        %p218 = pneg %p217
      $region34: #{tpu_custom_call.1} parent=5 // pred_check_branch
        %220 = sbr.rel (%p218) target = $region36
      $region35: #{tpu_custom_call.1} parent=5 // pred_region
        %s221 = ssub.s32 %s11, 2
        // Predicated region
        $region37: #{tpu_custom_call.1} parent=35 // pred_check
          %p222 = pneg %p92
        $region38: #{tpu_custom_call.1} parent=35 // pred_check_branch
          %224 = sbr.rel (%p222) target = $region40
        $region39: #{tpu_custom_call.1} parent=35 // pred_region
          %s225 = sand.u32 %s77, 1
          %s226 = scalar_lea.sflag [#allocation3], %s225
          %s227 = sand.u32 %s77, 1
          %s228 = scalar_lea.vmem [#allocation2], %s227
          %229 = dma.done %s226, 16
        $region40: #{tpu_custom_call.1} parent=35 // pred_fallthru
          _
      $region36: #{tpu_custom_call.1} parent=5 // pred_fallthru
        _
    $region6: #{tpu_custom_call.1} parent=1 // loop_footer
      %s15 = sadd.s32 1, %s11
    $region7: #{tpu_custom_call.1} parent=1 // loop_footer_branch
      %10 = sbr.rel target = $region3
    $region8: #{tpu_custom_call.1} parent=1 // loop_exit
      _
    %230 = vsyncpa [#allocation3], 1
    %s231 = scalar_lea.sflag [#allocation3], 1
    %232 = vsyncpa %s231, 1

</llo_original>
